<compile_context>
chip_gen: v6e
topology: v6e:2x2x1
jax: 0.10.0
libtpu: 0.0.40
codegen_flags: <defaults>
</compile_context>

<pallas_src>
import functools

import jax
import jax.numpy as jnp
from jax.experimental import pallas as pl
from jax.experimental.pallas import tpu as pltpu


def _bert_head_kernel(seq_len, last_ref, h_ref, vlen_ref, drop_ref,
                      wp_ref, bp_ref, wc_ref, bc_ref, out_ref, acc_ref):
    """Masked mean-pool accumulation over L tiles + pooler/dropout/classifier epilogue."""
    bi = pl.program_id(0)
    li = pl.program_id(1)
    n_l = pl.num_programs(1)
    tb, tl, _ = h_ref.shape

    @pl.when(li == 0)
    def _init():
        acc_ref[...] = jnp.zeros_like(acc_ref)

    # Skip fully-padded sequence tiles.  Their h DMA is also skipped because the
    # h index_map clamps the block index to last_ref[bi] (repeated block index).
    @pl.when(li <= last_ref[bi])
    def _accumulate():
        # gen_attention_mask for this (batch, seq) tile: position < valid_length
        pos = li * tl + jax.lax.broadcasted_iota(jnp.int32, (tb, tl), 1)
        mask = (pos < vlen_ref[...]).astype(jnp.bfloat16)            # [TB, TL]
        # Masked sum over the sequence on the MXU (bf16 x bf16, f32 accumulate):
        # avoids the [TB, TL, H] f32 upcast temporary entirely.
        part = jnp.einsum("bql,blh->bqh", mask[:, None, :], h_ref[...],
                          preferred_element_type=jnp.float32)        # [TB, 1, H]
        acc_ref[...] += part.reshape(acc_ref.shape)

    @pl.when(li == n_l - 1)
    def _finalize():
        # masked mean pool; valid-token count == min(valid_length, L), >= 1
        vlen_f = vlen_ref[...].astype(jnp.float32)                   # [TB, 1]
        denom = jnp.maximum(jnp.minimum(vlen_f, float(seq_len)), 1.0)
        pooled = acc_ref[...] / denom                                # [TB, H] f32
        # BERT-style pooler: dense + tanh (bf16 weights, f32 accumulate on MXU)
        pooler = jnp.tanh(
            jnp.dot(pooled.astype(jnp.bfloat16), wp_ref[...],
                    preferred_element_type=jnp.float32) + bp_ref[...])
        # nn.Dropout(p=dr_rate): inverted-dropout keep/scale mask (ones in eval)
        pooler = pooler * drop_ref[...]
        # classifier: nn.Linear(hidden_size, num_classes), 128-lane padded output
        out_ref[...] = (
            jnp.dot(pooler.astype(jnp.bfloat16), wc_ref[...],
                    preferred_element_type=jnp.float32) + bc_ref[...])


def _vmem_capacity_bytes():
    # Per-TensorCore VMEM: 128 MiB on v5e/v6e, 64 MiB on v7x.
    try:
        cap = getattr(pltpu.get_tpu_info(), "vmem_capacity_bytes", None)
        return int(cap) if cap else 64 * 1024 * 1024
    except Exception:
        return 64 * 1024 * 1024          # conservative default (v7x)


def _pick_tb(batch):
    # Prefer >= 2 batch tiles (so the "parallel" batch axis can feed both v7x
    # TensorCores) while keeping tb a multiple of 8 (sublane-aligned blocks).
    for cand in (64, 32, 16, 8):
        if batch % cand == 0 and batch // cand >= 2:
            return cand
    return batch


def _pick_tl(seq_len, tb, hidden, budget_bytes):
    # Largest divisor of L that is a multiple of 16 (bf16 sublane packing) or
    # the full L, whose bf16 block (tb, tl, H) fits the per-buffer VMEM budget.
    cands = [d for d in range(1, seq_len + 1)
             if seq_len % d == 0 and (d % 16 == 0 or d == seq_len)]
    fitting = [d for d in cands if tb * d * hidden * 2 <= budget_bytes]
    return max(fitting) if fitting else min(cands)


def bert_classifier_forward(token_ids, valid_length, segment_ids, params,
                            dr_rate, seed=0, training=True, tb=None, tl=None):
    # Glue (plain JAX): embedding lookup for the synthetic model stand-in.
    # Tables are bf16, so the gather + the kernel's dominant HBM read are bf16.
    word_emb = params["word_emb"].astype(jnp.bfloat16)
    seg_emb = params["seg_emb"].astype(jnp.bfloat16)
    h = word_emb[token_ids] + seg_emb[segment_ids]                   # [B, L, H] bf16
    B, L, H = h.shape
    C = params["w_cls"].shape[1]
    C_pad = 128 * pl.cdiv(C, 128)                                    # lane-dense logits

    vlen2d = valid_length.astype(jnp.int32).reshape(B, 1)

    # Attention mask is pure XLA; hoisted out of the kernel (lane-sparse store).
    attention_mask = (jax.lax.broadcasted_iota(jnp.int32, (B, L), 1)
                      < vlen2d).astype(jnp.float32)                  # [B, L]

    # Dropout keep/scale mask (RNG in the wrapper; applied inside the kernel).
    if dr_rate and training:
        keep = jax.random.bernoulli(jax.random.PRNGKey(seed), 1.0 - dr_rate, (B, H))
        drop_scale = keep.astype(jnp.float32) / jnp.float32(1.0 - dr_rate)
    else:
        drop_scale = jnp.ones((B, H), jnp.float32)

    # bf16 weights (halve DMA bytes + VMEM residency); biases stay f32.
    w_pool = params["w_pool"].astype(jnp.bfloat16)
    b_pool = params["b_pool"].reshape(1, H).astype(jnp.float32)
    w_cls = jnp.zeros((H, C_pad), jnp.bfloat16).at[:, :C].set(
        params["w_cls"].astype(jnp.bfloat16))
    b_cls = jnp.zeros((1, C_pad), jnp.float32).at[:, :C].set(
        params["b_cls"].reshape(1, C).astype(jnp.float32))

    if tb is None:
        tb = _pick_tb(B)
    assert B % tb == 0

    # VMEM budget per generation: ~3/4 of physical (48 MiB on v7x, 96 MiB on
    # v5e/v6e).  Invariant operands are double-buffered by the pipeline.
    vmem_cap = _vmem_capacity_bytes()
    vmem_limit = min((vmem_cap * 3) // 4, 112 * 1024 * 1024)
    fixed = 2 * (H * H * 2 + H * C_pad * 2 + (H + C_pad) * 4
                 + tb * H * 4 + tb * 4 + tb * C_pad * 4) + tb * max(H, 128) * 4
    h_budget = max((vmem_limit - fixed) // 2 - (1 << 20), 1 << 20)   # per h buffer
    h_budget = min(h_budget, 16 * 1024 * 1024)

    if tl is None:
        tl = _pick_tl(L, tb, H, h_budget)
    assert L % tl == 0 and (tl % 16 == 0 or tl == L)

    n_b, n_l = B // tb, L // tl

    # Scalar-prefetched, per-batch-tile index of the last sequence tile that
    # contains any valid token; later tiles' DMAs and accumulation are skipped.
    vmax = valid_length.astype(jnp.int32).reshape(n_b, tb).max(axis=1)
    last_tile = jnp.clip((vmax + tl - 1) // tl - 1, 0, n_l - 1).astype(jnp.int32)

    kernel = functools.partial(_bert_head_kernel, L)

    cost = pl.CostEstimate(
        flops=2 * B * L * H + 2 * B * H * H + 2 * B * H * C_pad,
        transcendentals=B * H,
        bytes_accessed=(B * L * H * 2 + (H * H + H * C_pad) * 2
                        + B * (H + C_pad + L) * 4),
    )

    logits_pad = pl.pallas_call(
        kernel,
        out_shape=jax.ShapeDtypeStruct((B, C_pad), jnp.float32),
        grid_spec=pltpu.PrefetchScalarGridSpec(
            num_scalar_prefetch=1,
            grid=(n_b, n_l),
            in_specs=[
                # NOTE: pipeline_mode=pl.Buffered(1) on the grid-invariant specs
                # below would single-buffer them and save a few MiB of VMEM;
                # left off here for portability of the standard pipeline path.
                pl.BlockSpec((tb, tl, H),
                             lambda b, l, lt: (b, jnp.minimum(l, lt[b]), 0)),  # h (bf16)
                pl.BlockSpec((tb, 1),     lambda b, l, lt: (b, 0)),   # valid_length
                pl.BlockSpec((tb, H),     lambda b, l, lt: (b, 0)),   # dropout keep/scale
                pl.BlockSpec((H, H),      lambda b, l, lt: (0, 0)),   # W_pool (bf16)
                pl.BlockSpec((1, H),      lambda b, l, lt: (0, 0)),   # b_pool
                pl.BlockSpec((H, C_pad),  lambda b, l, lt: (0, 0)),   # W_cls (bf16, padded)
                pl.BlockSpec((1, C_pad),  lambda b, l, lt: (0, 0)),   # b_cls (padded)
            ],
            out_specs=pl.BlockSpec((tb, C_pad), lambda b, l, lt: (b, 0)),
            scratch_shapes=[pltpu.VMEM((tb, H), jnp.float32)],        # masked-sum acc
        ),
        compiler_params=pltpu.CompilerParams(
            dimension_semantics=("parallel", "arbitrary"),
            vmem_limit_bytes=int(vmem_limit)),
        cost_estimate=cost,
    )(last_tile, h, vlen2d, drop_scale, w_pool, b_pool, w_cls, b_cls)

    return logits_pad[:, :C], attention_mask


def _reference_forward(token_ids, valid_length, segment_ids, params):
    """Plain-JAX reference (no dropout), mirroring the kernel's bf16 quantization."""
    we = params["word_emb"].astype(jnp.bfloat16)
    se = params["seg_emb"].astype(jnp.bfloat16)
    h = (we[token_ids] + se[segment_ids]).astype(jnp.float32)
    B, L, H = h.shape
    vlen2d = valid_length.astype(jnp.int32).reshape(B, 1)
    mask = (jax.lax.broadcasted_iota(jnp.int32, (B, L), 1) < vlen2d).astype(jnp.float32)
    denom = jnp.maximum(jnp.minimum(vlen2d.astype(jnp.float32), float(L)), 1.0)
    pooled = (h * mask[:, :, None]).sum(axis=1) / denom
    w_pool = params["w_pool"].astype(jnp.bfloat16).astype(jnp.float32)
    w_cls = params["w_cls"].astype(jnp.bfloat16).astype(jnp.float32)
    pooler = jnp.tanh(pooled.astype(jnp.bfloat16).astype(jnp.float32) @ w_pool
                      + params["b_pool"])
    logits = (pooler.astype(jnp.bfloat16).astype(jnp.float32) @ w_cls
              + params["b_cls"])
    return logits, mask


def init_params(key, vocab_size, hidden_size, num_classes):
    k0, k1, k2, k3, k4, k5 = jax.random.split(key, 6)
    scale = 0.02
    return {
        # Embedding tables stored bf16: halves the HBM bytes of the XLA gather
        # feeding the kernel's dominant [B, L, H] input.
        "word_emb": (scale * jax.random.normal(
            k0, (vocab_size, hidden_size), jnp.float32)).astype(jnp.bfloat16),
        "seg_emb": (scale * jax.random.normal(
            k1, (2, hidden_size), jnp.float32)).astype(jnp.bfloat16),
        "w_pool": scale * jax.random.normal(k2, (hidden_size, hidden_size), jnp.float32),
        "b_pool": scale * jax.random.normal(k3, (1, hidden_size), jnp.float32),
        # PyTorch nn.Linear weight is [C, H]; stored transposed [H, C] for x @ W.
        "w_cls": scale * jax.random.normal(k4, (hidden_size, num_classes), jnp.float32),
        "b_cls": scale * jax.random.normal(k5, (1, num_classes), jnp.float32),
    }


if __name__ == "__main__":
    B, L, H, C, VOCAB = 2, 64, 32, 4, 50
    DR_RATE = 0.1

    key = jax.random.PRNGKey(0)
    kp, kt, ks = jax.random.split(key, 3)

    params = init_params(kp, VOCAB, H, C)
    token_ids = jax.random.randint(kt, (B, L), 0, VOCAB, dtype=jnp.int32)
    segment_ids = jax.random.randint(ks, (B, L), 0, 2, dtype=jnp.int32)
    valid_length = jnp.array([5, 20], dtype=jnp.int32)   # trailing L tiles fully padded

    # Eval-mode check against the plain-JAX reference (dropout disabled);
    # tl=16 forces multiple sequence tiles so the padded-tile-skip path runs.
    logits_eval, mask_eval = bert_classifier_forward(
        token_ids, valid_length, segment_ids, params, DR_RATE,
        seed=0, training=False, tl=16)
    ref_logits, ref_mask = _reference_forward(
        token_ids, valid_length, segment_ids, params)
    jax.block_until_ready((logits_eval, mask_eval))
    assert jnp.allclose(mask_eval, ref_mask)
    assert jnp.allclose(logits_eval, ref_logits, atol=2e-3, rtol=2e-3)

    # Auto-tiled eval run (tl chosen from the VMEM budget).
    logits_auto, _ = bert_classifier_forward(
        token_ids, valid_length, segment_ids, params, DR_RATE,
        seed=0, training=False)
    jax.block_until_ready(logits_auto)
    assert jnp.allclose(logits_auto, ref_logits, atol=2e-3, rtol=2e-3)

    # Training-mode forward (dropout active), as in the PyTorch module's default mode.
    logits, attn_mask = bert_classifier_forward(
        token_ids, valid_length, segment_ids, params, DR_RATE,
        seed=0, training=True, tl=16)
    jax.block_until_ready((logits, attn_mask))

    assert logits.shape == (B, C) and attn_mask.shape == (B, L)
    print("KERNEL_OK")
</pallas_src>

<mosaic_0001>
module attributes {stable_mosaic.version = 11 : i64} {
  func.func @_bert_head_kernel(%arg0: i32, %arg1: i32, %arg2: memref<1xi32, #tpu.memory_space<smem>>, %arg3: memref<2x16x32xbf16, #tpu.memory_space<vmem>>, %arg4: memref<2x1xi32, #tpu.memory_space<vmem>>, %arg5: memref<2x32xf32, #tpu.memory_space<vmem>>, %arg6: memref<32x32xbf16, #tpu.memory_space<vmem>>, %arg7: memref<1x32xf32, #tpu.memory_space<vmem>>, %arg8: memref<32x128xbf16, #tpu.memory_space<vmem>>, %arg9: memref<1x128xf32, #tpu.memory_space<vmem>>, %arg10: memref<2x128xf32, #tpu.memory_space<vmem>>, %arg11: memref<2x32xf32, #tpu.memory_space<vmem>>) attributes {dimension_semantics = [#tpu.dimension_semantics<parallel>, #tpu.dimension_semantics<arbitrary>], iteration_bounds = array<i64: 1, 4>, scalar_prefetch = 1 : i64, scratch_operands = 1 : i64, tpu.core_type = #tpu.core_type<tc>, window_params = [{transform_indices = @transform_0, window_bounds = array<i64: 2, 16, 32>}, {transform_indices = @transform_1, window_bounds = array<i64: 2, 1>}, {transform_indices = @transform_2, window_bounds = array<i64: 2, 32>}, {pipeline_mode = #tpu.pipeline_mode<synchronous>, transform_indices = @transform_3, window_bounds = array<i64: 32, 32>}, {pipeline_mode = #tpu.pipeline_mode<synchronous>, transform_indices = @transform_4, window_bounds = array<i64: 1, 32>}, {pipeline_mode = #tpu.pipeline_mode<synchronous>, transform_indices = @transform_5, window_bounds = array<i64: 32, 128>}, {pipeline_mode = #tpu.pipeline_mode<synchronous>, transform_indices = @transform_6, window_bounds = array<i64: 1, 128>}, {transform_indices = @transform_7, window_bounds = array<i64: 2, 128>}]} {
    %c0_i32 = arith.constant 0 : i32
    %0 = arith.cmpi eq, %arg1, %c0_i32 : i32
    %1 = arith.extui %0 : i1 to i32
    %c0_i32_0 = arith.constant 0 : i32
    %2 = arith.cmpi ne, %1, %c0_i32_0 : i32
    scf.if %2 {
      %cst = arith.constant 0.000000e+00 : f32
      %11 = vector.broadcast %cst : f32 to vector<2x32xf32>
      %c0 = arith.constant 0 : index
      %c0_3 = arith.constant 0 : index
      %12 = vector.load %arg11[%c0, %c0_3] : memref<2x32xf32, #tpu.memory_space<vmem>>, vector<2x32xf32>
      tpu.vector_store %arg11[%c0, %c0_3], %11 {strides = array<i32>} : memref<2x32xf32, #tpu.memory_space<vmem>>, vector<2x32xf32>,
    } else {
    }
    %3 = arith.index_cast %arg0 : i32 to index
    %4 = memref.load %arg2[%3] : memref<1xi32, #tpu.memory_space<smem>>
    %5 = arith.cmpi sle, %arg1, %4 : i32
    %6 = arith.extui %5 : i1 to i32
    %c0_i32_1 = arith.constant 0 : i32
    %7 = arith.cmpi ne, %6, %c0_i32_1 : i32
    scf.if %7 {
      %c16_i32 = arith.constant 16 : i32
      %11 = arith.muli %arg1, %c16_i32 : i32
      %12 = tpu.iota {dimensions = array<i32: 1>} : vector<2x16xi32>
      %13 = vector.broadcast %11 : i32 to vector<2x16xi32>
      %14 = arith.addi %13, %12 : vector<2x16xi32>
      %c0 = arith.constant 0 : index
      %c0_3 = arith.constant 0 : index
      %15 = vector.load %arg4[%c0, %c0_3] : memref<2x1xi32, #tpu.memory_space<vmem>>, vector<2x1xi32>
      %16 = vector.broadcast %15 : vector<2x1xi32> to vector<2x16xi32>
      %17 = arith.cmpi slt, %14, %16 : vector<2x16xi32>
      %18 = arith.extui %17 : vector<2x16xi1> to vector<2x16xi32>
      %19 = arith.sitofp %18 : vector<2x16xi32> to vector<2x16xf32>
      %20 = arith.truncf %19 : vector<2x16xf32> to vector<2x16xbf16>
      %21 = vector.shape_cast %20 : vector<2x16xbf16> to vector<2x1x16xbf16>
      %c0_4 = arith.constant 0 : index
      %c0_5 = arith.constant 0 : index
      %c0_6 = arith.constant 0 : index
      %22 = vector.load %arg3[%c0_4, %c0_5, %c0_6] : memref<2x16x32xbf16, #tpu.memory_space<vmem>>, vector<2x16x32xbf16>
      "tpu.trace_start"() <{level = 10 : i32, message = "bql,blh->bqh"}> : () -> ()
      %cst = arith.constant dense<0.000000e+00> : vector<2x1x32xf32>
      %23 = tpu.matmul %21, %22, %cst {dimension_numbers = #tpu.dot_dimension_numbers<[2], [1], [1], [2], [0, 0, 0, 1, 1, 2], [0], [0]>} : vector<2x1x16xbf16>, vector<2x16x32xbf16>, vector<2x1x32xf32> -> vector<2x1x32xf32>
      "tpu.trace_stop"() : () -> ()
      %c0_7 = arith.constant 0 : index
      %c0_8 = arith.constant 0 : index
      %24 = vector.load %arg11[%c0_7, %c0_8] : memref<2x32xf32, #tpu.memory_space<vmem>>, vector<2x32xf32>
      %25 = vector.shape_cast %23 : vector<2x1x32xf32> to vector<2x32xf32>
      %26 = arith.addf %24, %25 : vector<2x32xf32>
      %c0_9 = arith.constant 0 : index
      %c0_10 = arith.constant 0 : index
      %27 = vector.load %arg11[%c0_9, %c0_10] : memref<2x32xf32, #tpu.memory_space<vmem>>, vector<2x32xf32>
      tpu.vector_store %arg11[%c0_9, %c0_10], %26 {strides = array<i32>} : memref<2x32xf32, #tpu.memory_space<vmem>>, vector<2x32xf32>,
    } else {
    }
    %c3_i32 = arith.constant 3 : i32
    %8 = arith.cmpi eq, %arg1, %c3_i32 : i32
    %9 = arith.extui %8 : i1 to i32
    %c0_i32_2 = arith.constant 0 : i32
    %10 = arith.cmpi ne, %9, %c0_i32_2 : i32
    scf.if %10 {
      %c0 = arith.constant 0 : index
      %c0_3 = arith.constant 0 : index
      %11 = vector.load %arg4[%c0, %c0_3] : memref<2x1xi32, #tpu.memory_space<vmem>>, vector<2x1xi32>
      %12 = arith.sitofp %11 : vector<2x1xi32> to vector<2x1xf32>
      %cst = arith.constant 6.400000e+01 : f32
      %13 = vector.broadcast %cst : f32 to vector<2x1xf32>
      %14 = arith.minimumf %12, %13 : vector<2x1xf32>
      %cst_4 = arith.constant 1.000000e+00 : f32
      %15 = vector.broadcast %cst_4 : f32 to vector<2x1xf32>
      %16 = arith.maximumf %14, %15 : vector<2x1xf32>
      %c0_5 = arith.constant 0 : index
      %c0_6 = arith.constant 0 : index
      %17 = vector.load %arg11[%c0_5, %c0_6] : memref<2x32xf32, #tpu.memory_space<vmem>>, vector<2x32xf32>
      %18 = vector.broadcast %16 : vector<2x1xf32> to vector<2x32xf32>
      %19 = arith.divf %17, %18 : vector<2x32xf32>
      %20 = arith.truncf %19 : vector<2x32xf32> to vector<2x32xbf16>
      %c0_7 = arith.constant 0 : index
      %c0_8 = arith.constant 0 : index
      %21 = vector.load %arg6[%c0_7, %c0_8] : memref<32x32xbf16, #tpu.memory_space<vmem>>, vector<32x32xbf16>
      %cst_9 = arith.constant dense<0.000000e+00> : vector<2x32xf32>
      %22 = tpu.matmul %20, %21, %cst_9 {dimension_numbers = #tpu.dot_dimension_numbers<[1], [0], [0], [1], [0, 0, 1, 1], [], []>} : vector<2x32xbf16>, vector<32x32xbf16>, vector<2x32xf32> -> vector<2x32xf32>
      %c0_10 = arith.constant 0 : index
      %c0_11 = arith.constant 0 : index
      %23 = vector.load %arg7[%c0_10, %c0_11] : memref<1x32xf32, #tpu.memory_space<vmem>>, vector<1x32xf32>
      %24 = vector.broadcast %23 : vector<1x32xf32> to vector<2x32xf32>
      %25 = arith.addf %22, %24 : vector<2x32xf32>
      %26 = math.tanh %25 : vector<2x32xf32>
      %c0_12 = arith.constant 0 : index
      %c0_13 = arith.constant 0 : index
      %27 = vector.load %arg5[%c0_12, %c0_13] : memref<2x32xf32, #tpu.memory_space<vmem>>, vector<2x32xf32>
      %28 = arith.mulf %26, %27 : vector<2x32xf32>
      %29 = arith.truncf %28 : vector<2x32xf32> to vector<2x32xbf16>
      %c0_14 = arith.constant 0 : index
      %c0_15 = arith.constant 0 : index
      %30 = vector.load %arg8[%c0_14, %c0_15] : memref<32x128xbf16, #tpu.memory_space<vmem>>, vector<32x128xbf16>
      %cst_16 = arith.constant dense<0.000000e+00> : vector<2x128xf32>
      %31 = tpu.matmul %29, %30, %cst_16 {dimension_numbers = #tpu.dot_dimension_numbers<[1], [0], [0], [1], [0, 0, 1, 1], [], []>} : vector<2x32xbf16>, vector<32x128xbf16>, vector<2x128xf32> -> vector<2x128xf32>
      %c0_17 = arith.constant 0 : index
      %c0_18 = arith.constant 0 : index
      %32 = vector.load %arg9[%c0_17, %c0_18] : memref<1x128xf32, #tpu.memory_space<vmem>>, vector<1x128xf32>
      %33 = vector.broadcast %32 : vector<1x128xf32> to vector<2x128xf32>
      %34 = arith.addf %31, %33 : vector<2x128xf32>
      %c0_19 = arith.constant 0 : index
      %c0_20 = arith.constant 0 : index
      %35 = vector.load %arg10[%c0_19, %c0_20] : memref<2x128xf32, #tpu.memory_space<vmem>>, vector<2x128xf32>
      tpu.vector_store %arg10[%c0_19, %c0_20], %34 {strides = array<i32>} : memref<2x128xf32, #tpu.memory_space<vmem>>, vector<2x128xf32>,
    } else {
    }
    return
  }
  func.func @transform_0(%arg0: i32, %arg1: i32, %arg2: memref<1xi32, #tpu.memory_space<smem>>) -> (i32, i32, i32) {
    %0 = arith.index_cast %arg0 : i32 to index
    %1 = memref.load %arg2[%0] : memref<1xi32, #tpu.memory_space<smem>>
    %2 = arith.minsi %arg1, %1 : i32
    %c0_i32 = arith.constant 0 : i32
    %c0_i32_0 = arith.constant 0 : i32
    return %arg0, %2, %c0_i32 : i32, i32, i32
  }
  func.func @transform_1(%arg0: i32, %arg1: i32, %arg2: memref<1xi32, #tpu.memory_space<smem>>) -> (i32, i32) {
    %c0_i32 = arith.constant 0 : i32
    %c0_i32_0 = arith.constant 0 : i32
    return %arg0, %c0_i32 : i32, i32
  }
  func.func @transform_2(%arg0: i32, %arg1: i32, %arg2: memref<1xi32, #tpu.memory_space<smem>>) -> (i32, i32) {
    %c0_i32 = arith.constant 0 : i32
    %c0_i32_0 = arith.constant 0 : i32
    return %arg0, %c0_i32 : i32, i32
  }
  func.func @transform_3(%arg0: i32, %arg1: i32, %arg2: memref<1xi32, #tpu.memory_space<smem>>) -> (i32, i32) {
    %c0_i32 = arith.constant 0 : i32
    %c0_i32_0 = arith.constant 0 : i32
    %c0_i32_1 = arith.constant 0 : i32
    return %c0_i32, %c0_i32_0 : i32, i32
  }
  func.func @transform_4(%arg0: i32, %arg1: i32, %arg2: memref<1xi32, #tpu.memory_space<smem>>) -> (i32, i32) {
    %c0_i32 = arith.constant 0 : i32
    %c0_i32_0 = arith.constant 0 : i32
    %c0_i32_1 = arith.constant 0 : i32
    return %c0_i32, %c0_i32_0 : i32, i32
  }
  func.func @transform_5(%arg0: i32, %arg1: i32, %arg2: memref<1xi32, #tpu.memory_space<smem>>) -> (i32, i32) {
    %c0_i32 = arith.constant 0 : i32
    %c0_i32_0 = arith.constant 0 : i32
    %c0_i32_1 = arith.constant 0 : i32
    return %c0_i32, %c0_i32_0 : i32, i32
  }
  func.func @transform_6(%arg0: i32, %arg1: i32, %arg2: memref<1xi32, #tpu.memory_space<smem>>) -> (i32, i32) {
    %c0_i32 = arith.constant 0 : i32
    %c0_i32_0 = arith.constant 0 : i32
    %c0_i32_1 = arith.constant 0 : i32
    return %c0_i32, %c0_i32_0 : i32, i32
  }
  func.func @transform_7(%arg0: i32, %arg1: i32, %arg2: memref<1xi32, #tpu.memory_space<smem>>) -> (i32, i32) {
    %c0_i32 = arith.constant 0 : i32
    %c0_i32_0 = arith.constant 0 : i32
    return %arg0, %c0_i32 : i32, i32
  }
}

</mosaic_0001>

<llo_original>
// kernel: tpu_custom_call.1
$region0: #{tpu_custom_call.1}
  #allocation0 [shape = 'u32[]', space=smem, size = 0x4, offset = 0x4, fixed_abs, tag = 'smem constant byte address 0x4 - core index']
  #allocation1 [shape = 'u32[144,128]{1,0:T(1,128)}', space=vmem, size = 0x12000, scoped, tag = 'internal scratch']
  #allocation2 [shape = 'f32[2,32]{1,0:T(2,128)}', space=vmem, size = 0x400, scoped, tag = 'scratch operand']
  #allocation3 [shape = 's32[1]{0}', space=sflag, size = 0x4, scoped, tag = 'scoped memory for tpu_custom_call.1']
  #allocation4 [shape = 's32[1]{0:T(128)S(6)}', space=smem, size = 0x200, scoped, tag = 'prefetched SMEM operand 0']
  %s0 = inlined_call_operand.<no memory space> [shape: s32[1], index: 0, kind: input, shape index: {}]
  %s1 = inlined_call_operand.vmem [shape: bf16[2,64,32], index: 1, kind: input, shape index: {}]
  %s2 = inlined_call_operand.vmem [shape: s32[2,1], index: 2, kind: input, shape index: {}]
  %s3 = inlined_call_operand.vmem [shape: f32[2,32], index: 3, kind: input, shape index: {}]
  %s4 = inlined_call_operand.vmem [shape: bf16[32,32], index: 4, kind: input, shape index: {}]
  %s5 = inlined_call_operand.vmem [shape: f32[1,32], index: 5, kind: input, shape index: {}]
  %s6 = inlined_call_operand.vmem [shape: bf16[32,128], index: 6, kind: input, shape index: {}]
  %s7 = inlined_call_operand.vmem [shape: f32[1,128], index: 7, kind: input, shape index: {}]
  %s8 = inlined_call_operand.hbm [shape: f32[2,128], index: 8, kind: output, shape index: {}]
  %s9 = sld [smem:[#allocation0]]
  $region114: #{tpu_custom_call.1} parent=0
    _
  %s11 = ssub.s32 1, %s9
  %s12 = scalar_select 0, %s11, %s9
  %13 = sst [smem:[#allocation4]] %s0
  $region1: #{tpu_custom_call.1} parent=0
    #allocation5 [shape = 'u8[16384]{0}', space=vmem, size = 0x4000, scoped, tag = 'input window, operand 1']
    #allocation6 [shape = 'u8[1024]{0}', space=vmem, size = 0x400, scoped, tag = 'output window, operand 0, single buffered']
    #allocation7 [shape = 's32[2]{0}', space=sflag, size = 0x8, scoped, tag = 'scoped memory for tpu_custom_call.1']
    %14 = vsyncpa [#allocation7], 0
    loop: start=0, step=1, limit=6
    $region2: #{tpu_custom_call.1} parent=1 // loop_pre_header
      _
    $region3: #{tpu_custom_call.1} parent=1 // loop_header
      %s16 = sphi 0, %s20
      %p17 = scmp.ge.s32.totalorder %s16, 6
      %s23 = sphi 0, %s35
      %s24 = sphi 0, %s31
      %s25 = sphi 0, %s23
      %s26 = sphi 0, %s24
      %s27 = sphi 0, %s25
      %s28 = sphi 0, %s26
      %s46 = sphi 0, %s48
      %s49 = sphi 0, %s46
      %s50 = sphi 0, %s49
      %s66 = sphi 0, %s50
      %s72 = sphi 0, %s74
      %s75 = sphi 0, %s72
      %s76 = sphi 0, %s75
      %s92 = sphi 0, %s76
      %s98 = sphi 0, %s100
      %s101 = sphi 0, %s98
      %s102 = sphi 0, %s101
      %s118 = sphi 0, %s102
      %s122 = sphi 0, %s122
      %s124 = sphi 0, %s122
      %s125 = sphi 0, %s124
      %s139 = sphi 0, %s125
      %s143 = sphi 0, %s143
      %s145 = sphi 0, %s143
      %s146 = sphi 0, %s145
      %s160 = sphi 0, %s146
      %s164 = sphi 0, %s164
      %s166 = sphi 0, %s164
      %s167 = sphi 0, %s166
      %s181 = sphi 0, %s167
      %s185 = sphi 0, %s185
      %s187 = sphi 0, %s185
      %s188 = sphi 0, %s187
      %s202 = sphi 0, %s188
      %s208 = sphi 0, %s210
      %s211 = sphi 0, %s208
      %s212 = sphi 0, %s211
      %s228 = sphi 0, %s212
    $region4: #{tpu_custom_call.1} parent=1 // loop_header_branch
      %19 = sbr.rel (%p17) target = $region8
    $region5: #{tpu_custom_call.1} parent=1 // loop_body
      %s21 = ssub.s32 %s16, 1
      %s22 = ssub.s32 %s16, 2
      %s29 = sadd.s32 1, %s24
      %p30 = scmp.ge.s32.totalorder %s29, 4
      %s31 = scalar_select %p30, 0, %s29
      %s32 = sadd.s32 1, %s23
      %s33 = scalar_select %p30, %s32, %s23
      %p34 = scmp.ge.s32.totalorder %s33, 1
      %s35 = scalar_select %p34, 0, %s33
      %s36 = sld [smem:[#allocation4 + %s23]]
      %p37 = scmp.lt.s32.totalorder %s24, %s36
      %s38 = scalar_select %p37, %s24, %s36
      %s39 = sld [smem:[#allocation4 + %s35]]
      %p40 = scmp.lt.s32.totalorder %s31, %s39
      %s41 = scalar_select %p40, %s31, %s39
      %s42 = ssub.s32 %s23, %s35
      %s43 = ssub.s32 %s38, %s41
      %s44 = sor.u32 %s42, %s43
      %p45 = scmp.eq.s32.totalorder %s44, 0
      %s47 = sadd.s32 %s46, 1
      %s48 = scalar_select %p45, %s46, %s47
      %p51 = pneg %p45
      %p52 = scmp.eq.s32.totalorder %s16, 3
      %p53 = por %p51, %p52
      %p54 = scmp.ne.s32.totalorder %s46, %s49
      %p55 = scmp.eq.s32.totalorder %s16, 0
      %p56 = por %p54, %p55
      %p57 = scmp.ne.s32.totalorder %s46, %s49
      %p58 = scmp.eq.s32.totalorder %s21, 3
      %p59 = por %p57, %p58
      %p60 = scmp.ne.s32.totalorder %s49, %s50
      %p61 = scmp.eq.s32.totalorder %s21, 0
      %p62 = por %p60, %p61
      %p63 = scmp.ne.s32.totalorder %s49, %s50
      %p64 = scmp.eq.s32.totalorder %s22, 3
      %p65 = por %p63, %p64
      %p67 = scmp.ne.s32.totalorder %s50, %s66
      %p68 = scmp.eq.s32.totalorder %s22, 0
      %p69 = por %p67, %p68
      %s70 = ssub.s32 %s23, %s35
      %p71 = scmp.eq.s32.totalorder %s70, 0
      %s73 = sadd.s32 %s72, 1
      %s74 = scalar_select %p71, %s72, %s73
      %p77 = pneg %p71
      %p78 = scmp.eq.s32.totalorder %s16, 3
      %p79 = por %p77, %p78
      %p80 = scmp.ne.s32.totalorder %s72, %s75
      %p81 = scmp.eq.s32.totalorder %s16, 0
      %p82 = por %p80, %p81
      %p83 = scmp.ne.s32.totalorder %s72, %s75
      %p84 = scmp.eq.s32.totalorder %s21, 3
      %p85 = por %p83, %p84
      %p86 = scmp.ne.s32.totalorder %s75, %s76
      %p87 = scmp.eq.s32.totalorder %s21, 0
      %p88 = por %p86, %p87
      %p89 = scmp.ne.s32.totalorder %s75, %s76
      %p90 = scmp.eq.s32.totalorder %s22, 3
      %p91 = por %p89, %p90
      %p93 = scmp.ne.s32.totalorder %s76, %s92
      %p94 = scmp.eq.s32.totalorder %s22, 0
      %p95 = por %p93, %p94
      %s96 = ssub.s32 %s23, %s35
      %p97 = scmp.eq.s32.totalorder %s96, 0
      %s99 = sadd.s32 %s98, 1
      %s100 = scalar_select %p97, %s98, %s99
      %p103 = pneg %p97
      %p104 = scmp.eq.s32.totalorder %s16, 3
      %p105 = por %p103, %p104
      %p106 = scmp.ne.s32.totalorder %s98, %s101
      %p107 = scmp.eq.s32.totalorder %s16, 0
      %p108 = por %p106, %p107
      %p109 = scmp.ne.s32.totalorder %s98, %s101
      %p110 = scmp.eq.s32.totalorder %s21, 3
      %p111 = por %p109, %p110
      %p112 = scmp.ne.s32.totalorder %s101, %s102
      %p113 = scmp.eq.s32.totalorder %s21, 0
      %p114 = por %p112, %p113
      %p115 = scmp.ne.s32.totalorder %s101, %s102
      %p116 = scmp.eq.s32.totalorder %s22, 3
      %p117 = por %p115, %p116
      %p119 = scmp.ne.s32.totalorder %s102, %s118
      %p120 = scmp.eq.s32.totalorder %s22, 0
      %p121 = por %p119, %p120
      %s123 = sadd.s32 %s122, 1
      %p126 = scmp.eq.s32.totalorder %s16, 3
      %p127 = scmp.ne.s32.totalorder %s122, %s124
      %p128 = scmp.eq.s32.totalorder %s16, 0
      %p129 = por %p127, %p128
      %p130 = scmp.ne.s32.totalorder %s122, %s124
      %p131 = scmp.eq.s32.totalorder %s21, 3
      %p132 = por %p130, %p131
      %p133 = scmp.ne.s32.totalorder %s124, %s125
      %p134 = scmp.eq.s32.totalorder %s21, 0
      %p135 = por %p133, %p134
      %p136 = scmp.ne.s32.totalorder %s124, %s125
      %p137 = scmp.eq.s32.totalorder %s22, 3
      %p138 = por %p136, %p137
      %p140 = scmp.ne.s32.totalorder %s125, %s139
      %p141 = scmp.eq.s32.totalorder %s22, 0
      %p142 = por %p140, %p141
      %s144 = sadd.s32 %s143, 1
      %p147 = scmp.eq.s32.totalorder %s16, 3
      %p148 = scmp.ne.s32.totalorder %s143, %s145
      %p149 = scmp.eq.s32.totalorder %s16, 0
      %p150 = por %p148, %p149
      %p151 = scmp.ne.s32.totalorder %s143, %s145
      %p152 = scmp.eq.s32.totalorder %s21, 3
      %p153 = por %p151, %p152
      %p154 = scmp.ne.s32.totalorder %s145, %s146
      %p155 = scmp.eq.s32.totalorder %s21, 0
      %p156 = por %p154, %p155
      %p157 = scmp.ne.s32.totalorder %s145, %s146
      %p158 = scmp.eq.s32.totalorder %s22, 3
      %p159 = por %p157, %p158
      %p161 = scmp.ne.s32.totalorder %s146, %s160
      %p162 = scmp.eq.s32.totalorder %s22, 0
      %p163 = por %p161, %p162
      %s165 = sadd.s32 %s164, 1
      %p168 = scmp.eq.s32.totalorder %s16, 3
      %p169 = scmp.ne.s32.totalorder %s164, %s166
      %p170 = scmp.eq.s32.totalorder %s16, 0
      %p171 = por %p169, %p170
      %p172 = scmp.ne.s32.totalorder %s164, %s166
      %p173 = scmp.eq.s32.totalorder %s21, 3
      %p174 = por %p172, %p173
      %p175 = scmp.ne.s32.totalorder %s166, %s167
      %p176 = scmp.eq.s32.totalorder %s21, 0
      %p177 = por %p175, %p176
      %p178 = scmp.ne.s32.totalorder %s166, %s167
      %p179 = scmp.eq.s32.totalorder %s22, 3
      %p180 = por %p178, %p179
      %p182 = scmp.ne.s32.totalorder %s167, %s181
      %p183 = scmp.eq.s32.totalorder %s22, 0
      %p184 = por %p182, %p183
      %s186 = sadd.s32 %s185, 1
      %p189 = scmp.eq.s32.totalorder %s16, 3
      %p190 = scmp.ne.s32.totalorder %s185, %s187
      %p191 = scmp.eq.s32.totalorder %s16, 0
      %p192 = por %p190, %p191
      %p193 = scmp.ne.s32.totalorder %s185, %s187
      %p194 = scmp.eq.s32.totalorder %s21, 3
      %p195 = por %p193, %p194
      %p196 = scmp.ne.s32.totalorder %s187, %s188
      %p197 = scmp.eq.s32.totalorder %s21, 0
      %p198 = por %p196, %p197
      %p199 = scmp.ne.s32.totalorder %s187, %s188
      %p200 = scmp.eq.s32.totalorder %s22, 3
      %p201 = por %p199, %p200
      %p203 = scmp.ne.s32.totalorder %s188, %s202
      %p204 = scmp.eq.s32.totalorder %s22, 0
      %p205 = por %p203, %p204
      %s206 = ssub.s32 %s23, %s35
      %p207 = scmp.eq.s32.totalorder %s206, 0
      %s209 = sadd.s32 %s208, 1
      %s210 = scalar_select %p207, %s208, %s209
      %p213 = pneg %p207
      %p214 = scmp.eq.s32.totalorder %s16, 3
      %p215 = por %p213, %p214
      %p216 = scmp.ne.s32.totalorder %s208, %s211
      %p217 = scmp.eq.s32.totalorder %s16, 0
      %p218 = por %p216, %p217
      %p219 = scmp.ne.s32.totalorder %s208, %s211
      %p220 = scmp.eq.s32.totalorder %s21, 3
      %p221 = por %p219, %p220
      %p222 = scmp.ne.s32.totalorder %s211, %s212
      %p223 = scmp.eq.s32.totalorder %s21, 0
      %p224 = por %p222, %p223
      %p225 = scmp.ne.s32.totalorder %s211, %s212
      %p226 = scmp.eq.s32.totalorder %s22, 3
      %p227 = por %p225, %p226
      %p229 = scmp.ne.s32.totalorder %s212, %s228
      %p230 = scmp.eq.s32.totalorder %s22, 0
      %p231 = por %p229, %p230
      %p232 = scmp.le.s32.totalorder 1, %s16
      %p233 = scmp.lt.s32.totalorder %s16, 5
      %p234 = pnand %p232, %p233
      %p235 = pneg %p234
      // Predicated region
      $region9: #{tpu_custom_call.1} parent=5 // pred_check
        _
      $region10: #{tpu_custom_call.1} parent=5 // pred_check_branch
        %237 = sbr.rel (%p234) target = $region12
      $region11: #{tpu_custom_call.1} parent=5 // pred_region
        %s238 = ssub.s32 %s16, 1
        // Predicated region
        $region13: #{tpu_custom_call.1} parent=11 // pred_check
          %p239 = pneg %p88
        $region14: #{tpu_custom_call.1} parent=11 // pred_check_branch
          %241 = sbr.rel (%p239) target = $region16
        $region15: #{tpu_custom_call.1} parent=11 // pred_region
          %p242 = scmp.lt.s32.totalorder %s25, 0
          %s243 = scalar_select %p242, %s25, 0
          %s244 = smul.addr %s243, 2
          %s245 = scalar_lea.vmem %s2, %s244
        $region16: #{tpu_custom_call.1} parent=11 // pred_fallthru
          _
        // Predicated region
        $region17: #{tpu_custom_call.1} parent=11 // pred_check
          %p246 = pneg %p114
        $region18: #{tpu_custom_call.1} parent=11 // pred_check_branch
          %248 = sbr.rel (%p246) target = $region20
        $region19: #{tpu_custom_call.1} parent=11 // pred_region
          %p249 = scmp.lt.s32.totalorder %s25, 0
          %s250 = scalar_select %p249, %s25, 0
          %s251 = smul.addr %s250, 2
          %s252 = scalar_lea.vmem %s3, %s251
        $region20: #{tpu_custom_call.1} parent=11 // pred_fallthru
          _
        // Predicated region
        $region21: #{tpu_custom_call.1} parent=11 // pred_check
          %p253 = pneg %p135
        $region22: #{tpu_custom_call.1} parent=11 // pred_check_branch
          %255 = sbr.rel (%p253) target = $region24
        $region23: #{tpu_custom_call.1} parent=11 // pred_region
          _
        $region24: #{tpu_custom_call.1} parent=11 // pred_fallthru
          _
        // Predicated region
        $region25: #{tpu_custom_call.1} parent=11 // pred_check
          %p256 = pneg %p156
        $region26: #{tpu_custom_call.1} parent=11 // pred_check_branch
          %258 = sbr.rel (%p256) target = $region28
        $region27: #{tpu_custom_call.1} parent=11 // pred_region
          _
        $region28: #{tpu_custom_call.1} parent=11 // pred_fallthru
          _
        // Predicated region
        $region29: #{tpu_custom_call.1} parent=11 // pred_check
          %p259 = pneg %p177
        $region30: #{tpu_custom_call.1} parent=11 // pred_check_branch
          %261 = sbr.rel (%p259) target = $region32
        $region31: #{tpu_custom_call.1} parent=11 // pred_region
          _
        $region32: #{tpu_custom_call.1} parent=11 // pred_fallthru
          _
        // Predicated region
        $region33: #{tpu_custom_call.1} parent=11 // pred_check
          %p262 = pneg %p198
        $region34: #{tpu_custom_call.1} parent=11 // pred_check_branch
          %264 = sbr.rel (%p262) target = $region36
        $region35: #{tpu_custom_call.1} parent=11 // pred_region
          _
        $region36: #{tpu_custom_call.1} parent=11 // pred_fallthru
          _
      $region12: #{tpu_custom_call.1} parent=5 // pred_fallthru
        _
      %p265 = scmp.lt.s32.totalorder %s16, 4
      // Predicated region
      $region37: #{tpu_custom_call.1} parent=5 // pred_check
        %p266 = pneg %p265
      $region38: #{tpu_custom_call.1} parent=5 // pred_check_branch
        %268 = sbr.rel (%p266) target = $region40
      $region39: #{tpu_custom_call.1} parent=5 // pred_region
        // Predicated region
        $region41: #{tpu_custom_call.1} parent=39 // pred_check
          %p269 = pneg %p56
        $region42: #{tpu_custom_call.1} parent=39 // pred_check_branch
          %271 = sbr.rel (%p269) target = $region44
        $region43: #{tpu_custom_call.1} parent=39 // pred_region
          %s272 = sand.u32 %s46, 1
          %s273 = sand.u32 %s46, 1
          %s274 = smul.addr %s273, 16
          %s275 = scalar_lea.vmem [#allocation5], %s274
          %s276 = sld [smem:[#allocation4 + %s23]]
          %p277 = scmp.lt.s32.totalorder %s24, %s276
          %s278 = scalar_select %p277, %s24, %s276
          %s279 = smul.u32 2, %s23
          %s280 = smul.u32 2, %s278
          %s281 = smul.addr %s279, 8
          %s282 = sadd.s32 %s280, %s281
          %s283 = smul.addr %s282, 4
          %s284 = scalar_lea.vmem %s1, %s283
          // Predicated region
          $region45: #{tpu_custom_call.1} parent=43 // pred_check
            _
          $region46: #{tpu_custom_call.1} parent=43 // pred_check_branch
            %286 = sbr.rel (0) target = $region48
          $region47: #{tpu_custom_call.1} parent=43 // pred_region
            // Predicated region
            $region49: #{tpu_custom_call.1} parent=47 // pred_check
              _
            $region50: #{tpu_custom_call.1} parent=47 // pred_check_branch
              %288 = sbr.rel target = $region52
            $region51: #{tpu_custom_call.1} parent=47 // pred_region
              // Predicated region
              $region64: #{tpu_custom_call.1} parent=51 // pred_check
                _
              $region65: #{tpu_custom_call.1} parent=51 // pred_check_branch
                %310 = sbr.rel (0) target = $region67
              $region66: #{tpu_custom_call.1} parent=51 // pred_region
                loop: start=0, step=1, limit=1
                $region68: #{tpu_custom_call.1} parent=66 // loop_pre_header
                  _
                $region69: #{tpu_custom_call.1} parent=66 // loop_header
                  %s312 = sphi 0, %s316
                  %p313 = scmp.ge.s32.totalorder %s312, 1
                  %s317 = sphi %s284, %s284
                  %s318 = sphi %s275, %s275
                $region70: #{tpu_custom_call.1} parent=66 // loop_header_branch
                  %315 = sbr.rel (%p313) target = $region74
                $region71: #{tpu_custom_call.1} parent=66 // loop_body
                  _
                $region72: #{tpu_custom_call.1} parent=66 // loop_footer
                  %s316 = sadd.s32 1, %s312
                $region73: #{tpu_custom_call.1} parent=66 // loop_footer_branch
                  %311 = sbr.rel target = $region69
                $region74: #{tpu_custom_call.1} parent=66 // loop_exit
                  _
                %s320 = ssub.s32 16, 1
                loop: start=0, step=1, limit=1
                $region75: #{tpu_custom_call.1} parent=66 // loop_pre_header
                  _
                $region76: #{tpu_custom_call.1} parent=66 // loop_header
                  %s322 = sphi 0, %s326
                  %p323 = scmp.ge.s32.totalorder %s322, 1
                  %s327 = sphi %s284, %s284
                  %s328 = sphi %s275, %s275
                $region77: #{tpu_custom_call.1} parent=66 // loop_header_branch
                  %325 = sbr.rel (%p323) target = $region81
                $region78: #{tpu_custom_call.1} parent=66 // loop_body
                  %v329 = vld [vmem:[%s327] sm:%s320]
                  %330 = vst [vmem:[%s328] sm:%s320] %v329
                  %v331 = vld [vmem:[%s327 + $0x4] sm:%s320]
                  %332 = vst [vmem:[%s328 + $0x4] sm:%s320] %v331
                  %v333 = vld [vmem:[%s327 + $0x20] sm:%s320]
                  %334 = vst [vmem:[%s328 + $0x8] sm:%s320] %v333
                  %v335 = vld [vmem:[%s327 + $0x24] sm:%s320]
                  %336 = vst [vmem:[%s328 + $0xc] sm:%s320] %v335
                $region79: #{tpu_custom_call.1} parent=66 // loop_footer
                  %s326 = sadd.s32 1, %s322
                $region80: #{tpu_custom_call.1} parent=66 // loop_footer_branch
                  %321 = sbr.rel target = $region76
                $region81: #{tpu_custom_call.1} parent=66 // loop_exit
                  _
              $region67: #{tpu_custom_call.1} parent=51 // pred_fallthru
                _
            $region52: #{tpu_custom_call.1} parent=47 // pred_fallthru
              _
            // Predicated region
            $region53: #{tpu_custom_call.1} parent=47 // pred_check
              _
            $region54: #{tpu_custom_call.1} parent=47 // pred_check_branch
              %290 = sbr.rel (0) target = $region56
            $region55: #{tpu_custom_call.1} parent=47 // pred_region
              %s292 = ssub.s32 16, 1
              loop: start=0, step=1, limit=1
              $region57: #{tpu_custom_call.1} parent=55 // loop_pre_header
                _
              $region58: #{tpu_custom_call.1} parent=55 // loop_header
                %s294 = sphi 0, %s298
                %p295 = scmp.ge.s32.totalorder %s294, 1
                %s299 = sphi %s284, %s284
                %s300 = sphi %s275, %s275
              $region59: #{tpu_custom_call.1} parent=55 // loop_header_branch
                %297 = sbr.rel (%p295) target = $region63
              $region60: #{tpu_custom_call.1} parent=55 // loop_body
                %v301 = vld [vmem:[%s299] sm:%s292]
                %302 = vst [vmem:[%s300] sm:%s292] %v301
                %v303 = vld [vmem:[%s299 + $0x4] sm:%s292]
                %304 = vst [vmem:[%s300 + $0x4] sm:%s292] %v303
                %v305 = vld [vmem:[%s299 + $0x20] sm:%s292]
                %306 = vst [vmem:[%s300 + $0x8] sm:%s292] %v305
                %v307 = vld [vmem:[%s299 + $0x24] sm:%s292]
                %308 = vst [vmem:[%s300 + $0xc] sm:%s292] %v307
              $region61: #{tpu_custom_call.1} parent=55 // loop_footer
                %s298 = sadd.s32 1, %s294
              $region62: #{tpu_custom_call.1} parent=55 // loop_footer_branch
                %293 = sbr.rel target = $region58
              $region63: #{tpu_custom_call.1} parent=55 // loop_exit
                _
            $region56: #{tpu_custom_call.1} parent=47 // pred_fallthru
              _
          $region48: #{tpu_custom_call.1} parent=43 // pred_fallthru
            _
          %337 = vnop
        $region44: #{tpu_custom_call.1} parent=39 // pred_fallthru
          _
      $region40: #{tpu_custom_call.1} parent=5 // pred_fallthru
        _
      %p338 = scmp.le.s32.totalorder 1, %s16
      %p339 = scmp.lt.s32.totalorder %s16, 5
      %p340 = pnand %p338, %p339
      %p341 = pneg %p340
      // Predicated region
      $region82: #{tpu_custom_call.1} parent=5 // pred_check
        _
      $region83: #{tpu_custom_call.1} parent=5 // pred_check_branch
        %343 = sbr.rel (%p340) target = $region85
      $region84: #{tpu_custom_call.1} parent=5 // pred_region
        %s344 = ssub.s32 %s16, 1
        %s345 = sand.u32 %s49, 1
        %s346 = sand.u32 %s49, 1
        %s347 = smul.addr %s346, 16
        %s348 = scalar_lea.vmem [#allocation5], %s347
        // Predicated region
        $region86: #{tpu_custom_call.1} parent=84 // pred_check
          %p349 = pneg %p62
        $region87: #{tpu_custom_call.1} parent=84 // pred_check_branch
          %351 = sbr.rel (%p349) target = $region89
        $region88: #{tpu_custom_call.1} parent=84 // pred_region
          _
        $region89: #{tpu_custom_call.1} parent=84 // pred_fallthru
          _
        %s352 = sand.u32 %s49, 1
        %s353 = sand.u32 %s49, 1
        %s354 = smul.addr %s353, 16
        %s355 = scalar_lea.vmem [#allocation5], %s354
        %p356 = pneg %p62
        %p357 = pneg %p59
        %p358 = scmp.lt.s32.totalorder %s25, 0
        %s359 = scalar_select %p358, %s25, 0
        %s360 = smul.addr %s359, 2
        %s361 = scalar_lea.vmem %s2, %s360
        %p362 = pneg %p88
        %p363 = pneg %p85
        %p364 = scmp.lt.s32.totalorder %s25, 0
        %s365 = scalar_select %p364, %s25, 0
        %s366 = smul.addr %s365, 2
        %s367 = scalar_lea.vmem %s3, %s366
        %p368 = pneg %p114
        %p369 = pneg %p111
        %p370 = pneg %p135
        %p371 = pneg %p132
        %p372 = pneg %p156
        %p373 = pneg %p153
        %p374 = pneg %p177
        %p375 = pneg %p174
        %p376 = pneg %p198
        %p377 = pneg %p195
        %p378 = pneg %p224
        %p379 = pneg %p221
        %s380 = sld [smem:[#allocation4 + %s25]]
        %p381 = scmp.lt.s32.totalorder %s26, %s380
        %s382 = scalar_select %p381, %s26, %s380
        %s383 = smul.u32 2, %s25
        %s384 = smul.u32 2, %s382
        %p385 = scmp.lt.s32.totalorder %s25, 0
        %s386 = scalar_select %p385, %s25, 0
        %s387 = smul.addr %s386, 2
        %s388 = scalar_lea.vmem %s2, %s387
        %p389 = scmp.lt.s32.totalorder %s25, 0
        %s390 = scalar_select %p389, %s25, 0
        %s391 = smul.addr %s390, 2
        %s392 = scalar_lea.vmem %s3, %s391
        %p394 = scmp.eq.s32.totalorder %s26, 0
        // Predicated region
        $region90: #{tpu_custom_call.1} parent=84 // pred_check
          %p395 = pneg %p394
        $region91: #{tpu_custom_call.1} parent=84 // pred_check_branch
          %397 = sbr.rel (%p395) target = $region93
        $region92: #{tpu_custom_call.1} parent=84 // pred_region
          %vm398 = vcmask 254976
          %399 = vst.msk [vmem:[#allocation2] sm:$0x3] %vm398, 0.0
        $region93: #{tpu_custom_call.1} parent=84 // pred_fallthru
          _
        %s400 = sld [smem:[#allocation4 + %s25]]
        %p401 = scmp.le.s32.totalorder %s26, %s400
        // Predicated region
        $region94: #{tpu_custom_call.1} parent=84 // pred_check
          %p402 = pneg %p401
        $region95: #{tpu_custom_call.1} parent=84 // pred_check_branch
          %404 = sbr.rel (%p402) target = $region97
        $region96: #{tpu_custom_call.1} parent=84 // pred_region
          %s405 = smul.u32 %s26, 16
          %v406 = vlaneseq
          %v407 = vand.u32 %v406, 127
          %v408 = vstv %s405
          %v409 = vadd.s32 %v408, %v407
          %v410 = vld [vmem:[%s388] sm:$0x3]
          %411 = vset.pattern.permute.xlu0 0
          %412 = vperm.xlu0 %411, %v410
          %v413 = vpop.permute.xlu0 %412
          %vm414 = vcmp.lt.s32.totalorder %v409, %v413
          %v415 = vsel %vm414, 1, 0
          %v416 = vcvt.s32.f32 %v415
          %v417 = vpack.c.bf16 %v416, %v416
          %v420 = vunpack.c.l.s4 1966171168
          %v421 = vunpack.c.0.s8 %v420
          %v422 = vlaneseq
          %v423 = vshrl.u32 %v422, 7
          %v424 = vsub.s32 %v421, %v423
          %v425 = vrot.slane %v417, %v424
          %v427 = vunpack.c.l.s4 1966171168
          %v428 = vunpack.c.0.s8 %v427
          %v429 = vlaneseq
          %v430 = vshrl.u32 %v429, 7
          %v431 = vsub.s32 %v428, %v430
          %v432 = vrot.slane %v425, %v431
          %v433 = vunpack.i.l.s16 %v432
          %v434 = vunpack.i.h.s16 %v432
          %v435 = vld [vmem:[%s348] sm:$0xf]
          %v436 = vld [vmem:[%s348 + $0x4] sm:$0xf]
          %v437 = vld [vmem:[%s348 + $0x8] sm:$0xf]
          %v438 = vld [vmem:[%s348 + $0xc] sm:$0xf]
          %v439 = vpack.i.b16 %v433, %v433
          %v440 = vlaneseq
          %v441 = vshrl.u32 %v440, 7
          %v442 = vsub.s32 0, %v441
          %v443 = vrot.slane %v439, %v442
          %v446 = vunpack.c.l.b16 %v435
          %v447 = vunpack.c.l.b16 %v436
          %v448 = vpack.c.b16 %v447, %v446
          %vm450 = vcmask 130048
          %v452 = vsel %vm450, %v443, 0
          %454 = vmatprep.subr.bf16.mxu0 0
          %455 = vmatpush1.bf16.msra.mxu0 0
          %456 = vmatprep.subr.bf16.mxu0 0
          %457 = vmatpush1.bf16.msra.mxu0 0
          %458 = vmatprep.subr.bf16.mxu0 0
          %459 = vmatpush1.bf16.msra.mxu0 0
          %460 = vmatprep.subr.bf16.mxu0 0
          %461 = vmatpush1.bf16.msra.mxu0 0
          %462 = vmatprep.subr.bf16.mxu0 0
          %463 = vmatpush1.bf16.msra.mxu0 0
          %464 = vmatprep.subr.bf16.mxu0 0
          %465 = vmatpush1.bf16.msra.mxu0 0
          %466 = vmatprep.subr.bf16.mxu0 0
          %467 = vmatpush1.bf16.msra.mxu0 0
          %468 = vmatprep.subr.bf16.mxu0 0
          %469 = vmatpush1.bf16.msra.mxu0 %v448
          %470 = vmatprep.subr.bf16.mxu0 0
          %471 = vmatpush2.bf16.msra.mxu0 0
          %472 = vmatprep.subr.bf16.mxu0 0
          %473 = vmatpush2.bf16.msra.mxu0 0
          %474 = vmatprep.subr.bf16.mxu0 0
          %475 = vmatpush2.bf16.msra.mxu0 0
          %476 = vmatprep.subr.bf16.mxu0 0
          %477 = vmatpush2.bf16.msra.mxu0 0
          %478 = vmatprep.subr.bf16.mxu0 0
          %479 = vmatpush2.bf16.msra.mxu0 0
          %480 = vmatprep.subr.bf16.mxu0 0
          %481 = vmatpush2.bf16.msra.mxu0 0
          %482 = vmatprep.subr.bf16.mxu0 0
          %483 = vmatpush2.bf16.msra.mxu0 0
          %484 = vmatprep.subr.bf16.mxu0 0
          %485 = vmatpush2.bf16.msra.mxu0 0
          %486 = vmatprep.mubr.bf16.mxu0 0
          %487 = vmatmul.mubr.bf16.gmra.mxu0 %v452
          %v488 = vpop.f32.mrf.mxu0
          %v489 = vadd.f32 0.0, %v488
          %v490 = vpop.f32.mrf.mxu0
          %v491 = vpop.f32.mrf.mxu0
          %v492 = vpop.f32.mrf.mxu0
          %493 = vdwg.mxu0
          %v494 = vpack.i.b16 %v434, %v434
          %v495 = vlaneseq
          %v496 = vshrl.u32 %v495, 7
          %v497 = vsub.s32 0, %v496
          %v498 = vrot.slane %v494, %v497
          %v501 = vunpack.c.l.b16 %v437
          %v502 = vunpack.c.l.b16 %v438
          %v503 = vpack.c.b16 %v502, %v501
          %v506 = vsel %vm450, %v498, 0
          %508 = vmatprep.subr.bf16.mxu0 0
          %509 = vmatpush1.bf16.msra.mxu0 0
          %510 = vmatprep.subr.bf16.mxu0 0
          %511 = vmatpush1.bf16.msra.mxu0 0
          %512 = vmatprep.subr.bf16.mxu0 0
          %513 = vmatpush1.bf16.msra.mxu0 0
          %514 = vmatprep.subr.bf16.mxu0 0
          %515 = vmatpush1.bf16.msra.mxu0 0
          %516 = vmatprep.subr.bf16.mxu0 0
          %517 = vmatpush1.bf16.msra.mxu0 0
          %518 = vmatprep.subr.bf16.mxu0 0
          %519 = vmatpush1.bf16.msra.mxu0 0
          %520 = vmatprep.subr.bf16.mxu0 0
          %521 = vmatpush1.bf16.msra.mxu0 0
          %522 = vmatprep.subr.bf16.mxu0 0
          %523 = vmatpush1.bf16.msra.mxu0 %v503
          %524 = vmatprep.subr.bf16.mxu0 0
          %525 = vmatpush2.bf16.msra.mxu0 0
          %526 = vmatprep.subr.bf16.mxu0 0
          %527 = vmatpush2.bf16.msra.mxu0 0
          %528 = vmatprep.subr.bf16.mxu0 0
          %529 = vmatpush2.bf16.msra.mxu0 0
          %530 = vmatprep.subr.bf16.mxu0 0
          %531 = vmatpush2.bf16.msra.mxu0 0
          %532 = vmatprep.subr.bf16.mxu0 0
          %533 = vmatpush2.bf16.msra.mxu0 0
          %534 = vmatprep.subr.bf16.mxu0 0
          %535 = vmatpush2.bf16.msra.mxu0 0
          %536 = vmatprep.subr.bf16.mxu0 0
          %537 = vmatpush2.bf16.msra.mxu0 0
          %538 = vmatprep.subr.bf16.mxu0 0
          %539 = vmatpush2.bf16.msra.mxu0 0
          %540 = vmatprep.mubr.bf16.mxu0 0
          %541 = vmatmul.mubr.bf16.gmra.mxu0 %v506
          %v542 = vpop.f32.mrf.mxu0
          %v543 = vadd.f32 0.0, %v542
          %v544 = vpop.f32.mrf.mxu0
          %v545 = vpop.f32.mrf.mxu0
          %v546 = vpop.f32.mrf.mxu0
          %547 = vdwg.mxu0
          %v548 = vld [vmem:[#allocation2] sm:$0x3]
          %v551 = vrot.slane %v543, 7
          %vm552 = vcmask 1041409
          %v553 = vsel %vm552, %v551, %v489
          %v555 = vadd.f32 %v548, %v553
          %vm556 = vcmask 254976
          %557 = vst.msk [vmem:[#allocation2] sm:$0x3] %vm556, %v555
        $region97: #{tpu_custom_call.1} parent=84 // pred_fallthru
          _
        %p558 = scmp.eq.s32.totalorder %s26, 3
        // Predicated region
        $region98: #{tpu_custom_call.1} parent=84 // pred_check
          %p559 = pneg %p558
        $region99: #{tpu_custom_call.1} parent=84 // pred_check_branch
          %561 = sbr.rel (%p559) target = $region101
        $region100: #{tpu_custom_call.1} parent=84 // pred_region
          %v562 = vld [vmem:[%s388] sm:$0x3]
          %v563 = vcvt.s32.f32 %v562
          %v564 = vmin.f32 %v563, 64.0
          %v565 = vmax.f32 %v564, 1.0
          %v566 = vld [vmem:[#allocation2] sm:$0x3]
          %568 = vset.pattern.permute.xlu0 0
          %569 = vperm.xlu0 %568, %v565
          %v570 = vpop.permute.xlu0 %569
          %v572 = vrcp.pop %v570
          %v573 = vmul.f32 %v566, %v572
          %v574 = vpack.c.bf16 %v573, %v573
          %v575 = vld [vmem:[%s4] sm:$0xf]
          %v576 = vld [vmem:[%s4 + $0x4] sm:$0xf]
          %v577 = vld [vmem:[%s4 + $0x8] sm:$0xf]
          %v578 = vld [vmem:[%s4 + $0xc] sm:$0xf]
          %v579 = vld [vmem:[%s5] sm:$0x1]
          %v581 = vlaneseq
          %v582 = vshrl.u32 %v581, 7
          %v583 = vsub.s32 0, %v582
          %v584 = vrot.slane %v579, %v583
          %v590 = vunpack.c.l.b16 %v575
          %v591 = vunpack.c.l.b16 %v576
          %v592 = vunpack.c.l.b16 %v577
          %v593 = vunpack.c.l.b16 %v578
          %v594 = vpack.c.b16 %v591, %v590
          %v595 = vpack.c.b16 %v593, %v592
          %vm598 = vcmask 261120
          %v600 = vsel %vm598, %v574, 0
          %602 = vmatprep.subr.bf16.mxu0 0
          %603 = vmatpush1.bf16.msra.mxu0 0
          %604 = vmatprep.subr.bf16.mxu0 0
          %605 = vmatpush1.bf16.msra.mxu0 0
          %606 = vmatprep.subr.bf16.mxu0 0
          %607 = vmatpush1.bf16.msra.mxu0 0
          %608 = vmatprep.subr.bf16.mxu0 0
          %609 = vmatpush1.bf16.msra.mxu0 0
          %610 = vmatprep.subr.bf16.mxu0 0
          %611 = vmatpush1.bf16.msra.mxu0 0
          %612 = vmatprep.subr.bf16.mxu0 0
          %613 = vmatpush1.bf16.msra.mxu0 0
          %614 = vmatprep.subr.bf16.mxu0 0
          %615 = vmatpush1.bf16.msra.mxu0 %v595
          %616 = vmatprep.subr.bf16.mxu0 0
          %617 = vmatpush1.bf16.msra.mxu0 %v594
          %618 = vmatprep.subr.bf16.mxu0 0
          %619 = vmatpush2.bf16.msra.mxu0 0
          %620 = vmatprep.subr.bf16.mxu0 0
          %621 = vmatpush2.bf16.msra.mxu0 0
          %622 = vmatprep.subr.bf16.mxu0 0
          %623 = vmatpush2.bf16.msra.mxu0 0
          %624 = vmatprep.subr.bf16.mxu0 0
          %625 = vmatpush2.bf16.msra.mxu0 0
          %626 = vmatprep.subr.bf16.mxu0 0
          %627 = vmatpush2.bf16.msra.mxu0 0
          %628 = vmatprep.subr.bf16.mxu0 0
          %629 = vmatpush2.bf16.msra.mxu0 0
          %630 = vmatprep.subr.bf16.mxu0 0
          %631 = vmatpush2.bf16.msra.mxu0 0
          %632 = vmatprep.subr.bf16.mxu0 0
          %633 = vmatpush2.bf16.msra.mxu0 0
          %634 = vmatprep.mubr.bf16.mxu0 0
          %635 = vmatmul.mubr.bf16.gmra.mxu0 %v600
          %v636 = vpop.f32.mrf.mxu0
          %v637 = vadd.f32 %v584, %v636
          %v638 = vpop.f32.mrf.mxu0
          %v639 = vpop.f32.mrf.mxu0
          %v640 = vpop.f32.mrf.mxu0
          %641 = vdwg.mxu0
          %v642 = vtanh.pop %v637
          %v643 = vld [vmem:[%s392] sm:$0x3]
          %v644 = vmul.f32 %v642, %v643
          %v645 = vpack.c.bf16 %v644, %v644
          %v646 = vld [vmem:[%s6] sm:$0xf]
          %v647 = vld [vmem:[%s6 + $0x4] sm:$0xf]
          %v648 = vld [vmem:[%s6 + $0x8] sm:$0xf]
          %v649 = vld [vmem:[%s6 + $0xc] sm:$0xf]
          %v650 = vld [vmem:[%s7] sm:$0x1]
          %v652 = vlaneseq
          %v653 = vshrl.u32 %v652, 7
          %v654 = vsub.s32 0, %v653
          %v655 = vrot.slane %v650, %v654
          %v661 = vunpack.c.l.b16 %v646
          %v662 = vunpack.c.l.b16 %v647
          %v663 = vunpack.c.l.b16 %v648
          %v664 = vunpack.c.l.b16 %v649
          %v665 = vpack.c.b16 %v662, %v661
          %v666 = vpack.c.b16 %v664, %v663
          %v670 = vsel %vm598, %v645, 0
          %672 = vmatprep.subr.bf16.mxu0 0
          %673 = vmatpush1.bf16.msra.mxu0 0
          %674 = vmatprep.subr.bf16.mxu0 0
          %675 = vmatpush1.bf16.msra.mxu0 0
          %676 = vmatprep.subr.bf16.mxu0 0
          %677 = vmatpush1.bf16.msra.mxu0 0
          %678 = vmatprep.subr.bf16.mxu0 0
          %679 = vmatpush1.bf16.msra.mxu0 0
          %680 = vmatprep.subr.bf16.mxu0 0
          %681 = vmatpush1.bf16.msra.mxu0 0
          %682 = vmatprep.subr.bf16.mxu0 0
          %683 = vmatpush1.bf16.msra.mxu0 0
          %684 = vmatprep.subr.bf16.mxu0 0
          %685 = vmatpush1.bf16.msra.mxu0 %v666
          %686 = vmatprep.subr.bf16.mxu0 0
          %687 = vmatpush1.bf16.msra.mxu0 %v665
          %688 = vmatprep.subr.bf16.mxu0 0
          %689 = vmatpush2.bf16.msra.mxu0 0
          %690 = vmatprep.subr.bf16.mxu0 0
          %691 = vmatpush2.bf16.msra.mxu0 0
          %692 = vmatprep.subr.bf16.mxu0 0
          %693 = vmatpush2.bf16.msra.mxu0 0
          %694 = vmatprep.subr.bf16.mxu0 0
          %695 = vmatpush2.bf16.msra.mxu0 0
          %696 = vmatprep.subr.bf16.mxu0 0
          %697 = vmatpush2.bf16.msra.mxu0 0
          %698 = vmatprep.subr.bf16.mxu0 0
          %699 = vmatpush2.bf16.msra.mxu0 0
          %700 = vmatprep.subr.bf16.mxu0 0
          %701 = vmatpush2.bf16.msra.mxu0 0
          %702 = vmatprep.subr.bf16.mxu0 0
          %703 = vmatpush2.bf16.msra.mxu0 0
          %704 = vmatprep.mubr.bf16.mxu0 0
          %705 = vmatmul.mubr.bf16.gmra.mxu0 %v670
          %v706 = vpop.f32.mrf.mxu0
          %v707 = vadd.f32 %v655, %v706
          %v708 = vpop.f32.mrf.mxu0
          %v709 = vpop.f32.mrf.mxu0
          %v710 = vpop.f32.mrf.mxu0
          %711 = vdwg.mxu0
          %712 = vst [vmem:[#allocation6] sm:$0x3] %v707
        $region101: #{tpu_custom_call.1} parent=84 // pred_fallthru
          _
        // Predicated region
        $region102: #{tpu_custom_call.1} parent=84 // pred_check
          %p713 = pneg %p221
        $region103: #{tpu_custom_call.1} parent=84 // pred_check_branch
          %715 = sbr.rel (%p713) target = $region105
        $region104: #{tpu_custom_call.1} parent=84 // pred_region
          %s717 = ssub.s32 32, 32
          %718 = vsyncadd [#allocation7], %s717
          %s719 = smul.addr %s25, 32
          %s720 = scalar_lea.hbm %s8, %s719
          %s722 = sshll.u32 [#allocation6], 4
          %s723 = int_to_ptr.vmem [resolvable:$true] %s722
          %725 = dma.vmem_to_hbm [thread:$0]  %s723, 32, %s720, [#allocation7]
        $region105: #{tpu_custom_call.1} parent=84 // pred_fallthru
          _
        // Predicated region
        $region106: #{tpu_custom_call.1} parent=84 // pred_check
          %p726 = pneg %p221
        $region107: #{tpu_custom_call.1} parent=84 // pred_check_branch
          %728 = sbr.rel (%p726) target = $region109
        $region108: #{tpu_custom_call.1} parent=84 // pred_region
          %729 = dma.done [#allocation7], 32
        $region109: #{tpu_custom_call.1} parent=84 // pred_fallthru
          _
      $region85: #{tpu_custom_call.1} parent=5 // pred_fallthru
        _
      %p730 = scmp.le.s32.totalorder 2, %s16
      // Predicated region
      $region110: #{tpu_custom_call.1} parent=5 // pred_check
        %p731 = pneg %p730
      $region111: #{tpu_custom_call.1} parent=5 // pred_check_branch
        %733 = sbr.rel (%p731) target = $region113
      $region112: #{tpu_custom_call.1} parent=5 // pred_region
        %s734 = ssub.s32 %s16, 2
      $region113: #{tpu_custom_call.1} parent=5 // pred_fallthru
        _
    $region6: #{tpu_custom_call.1} parent=1 // loop_footer
      %s20 = sadd.s32 1, %s16
    $region7: #{tpu_custom_call.1} parent=1 // loop_footer_branch
      %15 = sbr.rel target = $region3
    $region8: #{tpu_custom_call.1} parent=1 // loop_exit
      _
    %735 = vsyncpa [#allocation7], 1
    %s736 = scalar_lea.sflag [#allocation7], 1
    %737 = vsyncpa %s736, 1

</llo_original>
